<compile_context>
chip_gen: v7x
topology: tpu7x:2x2x1
jax: 0.10.0
libtpu: 0.0.40
codegen_flags: <defaults>
</compile_context>

<pallas_src>
import functools

import jax
import jax.numpy as jnp
from jax import lax
from jax.experimental import pallas as pl
from jax.experimental.pallas import tpu as pltpu

SMOOTH = 1.0
MAX_BLOCK_BYTES = 4 * 1024 * 1024  # target f32 x-block size (v7x-safe, 2x-buffered)


def _soft_dice_partials_kernel(x_ref, y_ref, out_ref, *, c_dim, s_total, tile_r,
                               masked):
    # x_ref: (C, TILE_R, 128) f32 logits
    # y_ref: (TILE_R, 128) int labels
    # out_ref: (3, C, 128) f32 lane-dense partials [tp, sum_p, cnt]
    chans = [x_ref[c] for c in range(c_dim)]            # C x (TILE_R, 128)

    if masked:
        j = pl.program_id(1)
        row = lax.broadcasted_iota(jnp.int32, (tile_r, 128), 0)
        lane = lax.broadcasted_iota(jnp.int32, (tile_r, 128), 1)
        idx = (j * tile_r + row) * 128 + lane            # global spatial index
        valid = idx < s_total
        validf = valid.astype(jnp.float32)
        # Clamp out-of-bounds (unspecified) logits so exp stays finite; the
        # resulting uniform softmax columns are masked out of every sum below.
        chans = [jnp.where(valid, ch, 0.0) for ch in chans]

    # Softmax over the channel axis: C-1 dense maxes/adds + C exps + 1 recip.
    m = chans[0]
    for c in range(1, c_dim):
        m = jnp.maximum(m, chans[c])
    es = [jnp.exp(ch - m) for ch in chans]
    denom = es[0]
    for c in range(1, c_dim):
        denom = denom + es[c]
    inv = pl.reciprocal(denom, approx=False)             # exact, matches ref
    ps = [e * inv for e in es]                           # C x (TILE_R, 128)

    labels = y_ref[...].astype(jnp.int32)                # (TILE_R, 128)

    tp_rows, sp_rows, cnt_rows = [], [], []
    for c in range(c_dim):
        match = labels == c
        if masked:
            match = jnp.logical_and(match, valid)
        match_f = match.astype(jnp.float32)
        p_c = ps[c]
        tp_rows.append(jnp.sum(p_c * match_f, axis=0, keepdims=True))   # (1,128)
        if masked:
            sp_rows.append(jnp.sum(p_c * validf, axis=0, keepdims=True))
        else:
            sp_rows.append(jnp.sum(p_c, axis=0, keepdims=True))
        cnt_rows.append(jnp.sum(match_f, axis=0, keepdims=True))

    out_ref[0] = jnp.concatenate(tp_rows, axis=0)        # (C, 128)
    out_ref[1] = jnp.concatenate(sp_rows, axis=0)
    out_ref[2] = jnp.concatenate(cnt_rows, axis=0)


def soft_dice_loss(x, y, smooth=SMOOTH):
    """x: (N, C, H, W) float32 logits; y: (N, H, W) integer labels.

    Requires C >= 2 (the original module takes dc[1:], skipping background).
    """
    N, C, H, W = x.shape
    assert C >= 2, "SoftDiceLoss skips channel 0; needs at least 2 channels"
    S = H * W
    R = pl.cdiv(S, 128)
    s128 = R * 128

    x_r = x.reshape(N, C, S).astype(jnp.float32)
    label_dtype = jnp.int8 if C <= 127 else jnp.int32
    y_r = y.reshape(N, S).astype(label_dtype)
    if s128 != S:
        # TODO(synk): this lane-pad copy only triggers when H*W % 128 != 0; the
        # (much larger) row raggedness is handled mask-only in the kernel.
        x_r = jnp.pad(x_r, ((0, 0), (0, 0), (0, s128 - S)))
        y_r = jnp.pad(y_r, ((0, 0), (0, s128 - S)), constant_values=-1)
    x_r = x_r.reshape(N, C, R, 128)   # contiguous -> free reshape
    y_r = y_r.reshape(N, R, 128)

    # Tile sizing: ~MAX_BLOCK_BYTES f32 x-block; TILE_R a multiple of 32 so the
    # int8 label block is also tile-aligned.  Keeps 2x-buffered VMEM < ~10 MiB.
    max_tile_r = max(32, (MAX_BLOCK_BYTES // (C * 128 * 4)) // 32 * 32)
    if R <= max_tile_r:
        tile_r, nb = R, 1
    else:
        tile_r = max_tile_r
        nb = pl.cdiv(R, tile_r)

    masked = (s128 != S) or (R % tile_r != 0)

    kernel = functools.partial(_soft_dice_partials_kernel, c_dim=C, s_total=S,
                               tile_r=tile_r, masked=masked)

    parts = pl.pallas_call(
        kernel,
        out_shape=jax.ShapeDtypeStruct((N, nb, 3, C, 128), jnp.float32),
        grid_spec=pltpu.PrefetchScalarGridSpec(
            num_scalar_prefetch=0,
            grid=(N, nb),
            in_specs=[
                pl.BlockSpec((pl.Squeezed(), C, tile_r, 128),
                             lambda b, j: (b, 0, j, 0)),
                pl.BlockSpec((pl.Squeezed(), tile_r, 128),
                             lambda b, j: (b, j, 0)),
            ],
            out_specs=pl.BlockSpec(
                (pl.Squeezed(), pl.Squeezed(), 3, C, 128),
                lambda b, j: (b, j, 0, 0, 0)),
        ),
        compiler_params=pltpu.CompilerParams(
            dimension_semantics=("parallel", "parallel"),
            vmem_limit_bytes=32 * 1024 * 1024),
    )(x_r, y_r)

    # Tiny epilogue: reduce per-block, per-lane partials; recover fp/fn; dice.
    sums = jnp.sum(parts, axis=(0, 1, 4))   # (3, C)
    tp, sum_p, cnt = sums[0], sums[1], sums[2]
    fp = sum_p - tp
    fn = cnt - tp

    nominator = 2.0 * tp + smooth
    denominator = 2.0 * tp + fp + fn + smooth
    dc = nominator / (denominator + 1e-8)
    return -jnp.mean(dc[1:])                 # skip background channel 0


def _reference_loss(x, y, smooth=SMOOTH):
    # pure-JAX reference mirroring the PyTorch forward (apply_nonlin=softmax)
    p = jax.nn.softmax(x, axis=1)
    yoh = jax.nn.one_hot(y, x.shape[1], axis=1, dtype=x.dtype)
    axes = (0, 2, 3)
    tp = jnp.sum(p * yoh, axes)
    fp = jnp.sum(p * (1.0 - yoh), axes)
    fn = jnp.sum((1.0 - p) * yoh, axes)
    nominator = 2.0 * tp + smooth
    denominator = 2.0 * tp + fp + fn + smooth
    dc = nominator / (denominator + 1e-8)
    return -jnp.mean(dc[1:])


if __name__ == "__main__":
    key = jax.random.PRNGKey(0)
    kx, ky = jax.random.split(key)
    N, C, H, W = 2, 4, 16, 16
    x = jax.random.normal(kx, (N, C, H, W), dtype=jnp.float32)
    y = jax.random.randint(ky, (N, H, W), 0, C, dtype=jnp.int32)

    loss = soft_dice_loss(x, y)
    jax.block_until_ready(loss)

    ref = _reference_loss(x, y)
    assert jnp.allclose(loss, ref, atol=1e-5, rtol=1e-5), (loss, ref)
    print("KERNEL_OK")
</pallas_src>

<mosaic_0001>
module attributes {stable_mosaic.version = 11 : i64} {
  func.func @_soft_dice_partials_kernel(%arg0: i32, %arg1: i32, %arg2: memref<1x4x2x128xf32, #tpu.memory_space<vmem>>, %arg3: memref<1x2x128xi8, #tpu.memory_space<vmem>>, %arg4: memref<1x1x3x4x128xf32, #tpu.memory_space<vmem>>) attributes {dimension_semantics = [#tpu.dimension_semantics<parallel>, #tpu.dimension_semantics<parallel>], iteration_bounds = array<i64: 2, 1>, scalar_prefetch = 0 : i64, scratch_operands = 0 : i64, tpu.core_type = #tpu.core_type<tc>, window_params = [{transform_indices = @transform_0, window_bounds = array<i64: 1, 4, 2, 128>}, {transform_indices = @transform_1, window_bounds = array<i64: 1, 2, 128>}, {transform_indices = @transform_2, window_bounds = array<i64: 1, 1, 3, 4, 128>}]} {
    %c0 = arith.constant 0 : index
    %c0_0 = arith.constant 0 : index
    %c0_1 = arith.constant 0 : index
    %c0_2 = arith.constant 0 : index
    %0 = vector.load %arg2[%c0, %c0_0, %c0_1, %c0_2] : memref<1x4x2x128xf32, #tpu.memory_space<vmem>>, vector<1x1x2x128xf32>
    %1 = vector.shape_cast %0 : vector<1x1x2x128xf32> to vector<2x128xf32>
    %c0_3 = arith.constant 0 : index
    %c1 = arith.constant 1 : index
    %c0_4 = arith.constant 0 : index
    %c0_5 = arith.constant 0 : index
    %2 = vector.load %arg2[%c0_3, %c1, %c0_4, %c0_5] : memref<1x4x2x128xf32, #tpu.memory_space<vmem>>, vector<1x1x2x128xf32>
    %3 = vector.shape_cast %2 : vector<1x1x2x128xf32> to vector<2x128xf32>
    %c0_6 = arith.constant 0 : index
    %c2 = arith.constant 2 : index
    %c0_7 = arith.constant 0 : index
    %c0_8 = arith.constant 0 : index
    %4 = vector.load %arg2[%c0_6, %c2, %c0_7, %c0_8] : memref<1x4x2x128xf32, #tpu.memory_space<vmem>>, vector<1x1x2x128xf32>
    %5 = vector.shape_cast %4 : vector<1x1x2x128xf32> to vector<2x128xf32>
    %c0_9 = arith.constant 0 : index
    %c3 = arith.constant 3 : index
    %c0_10 = arith.constant 0 : index
    %c0_11 = arith.constant 0 : index
    %6 = vector.load %arg2[%c0_9, %c3, %c0_10, %c0_11] : memref<1x4x2x128xf32, #tpu.memory_space<vmem>>, vector<1x1x2x128xf32>
    %7 = vector.shape_cast %6 : vector<1x1x2x128xf32> to vector<2x128xf32>
    %8 = arith.maximumf %1, %3 : vector<2x128xf32>
    %9 = arith.maximumf %8, %5 : vector<2x128xf32>
    %10 = arith.maximumf %9, %7 : vector<2x128xf32>
    %11 = arith.subf %1, %10 : vector<2x128xf32>
    %12 = math.exp %11 : vector<2x128xf32>
    %13 = arith.subf %3, %10 : vector<2x128xf32>
    %14 = math.exp %13 : vector<2x128xf32>
    %15 = arith.subf %5, %10 : vector<2x128xf32>
    %16 = math.exp %15 : vector<2x128xf32>
    %17 = arith.subf %7, %10 : vector<2x128xf32>
    %18 = math.exp %17 : vector<2x128xf32>
    %19 = arith.addf %12, %14 : vector<2x128xf32>
    %20 = arith.addf %19, %16 : vector<2x128xf32>
    %21 = arith.addf %20, %18 : vector<2x128xf32>
    %22 = tpu.reciprocal %21 : vector<2x128xf32> -> vector<2x128xf32>
    %23 = arith.mulf %12, %22 : vector<2x128xf32>
    %24 = arith.mulf %14, %22 : vector<2x128xf32>
    %25 = arith.mulf %16, %22 : vector<2x128xf32>
    %26 = arith.mulf %18, %22 : vector<2x128xf32>
    %c0_12 = arith.constant 0 : index
    %c0_13 = arith.constant 0 : index
    %c0_14 = arith.constant 0 : index
    %27 = vector.load %arg3[%c0_12, %c0_13, %c0_14] : memref<1x2x128xi8, #tpu.memory_space<vmem>>, vector<1x2x128xi8>
    %28 = vector.shape_cast %27 : vector<1x2x128xi8> to vector<2x128xi8>
    %29 = arith.extsi %28 : vector<2x128xi8> to vector<2x128xi32>
    %c0_i32 = arith.constant 0 : i32
    %30 = vector.broadcast %c0_i32 : i32 to vector<2x128xi32>
    %31 = arith.cmpi eq, %29, %30 : vector<2x128xi32>
    %32 = arith.extui %31 : vector<2x128xi1> to vector<2x128xi32>
    %33 = arith.sitofp %32 : vector<2x128xi32> to vector<2x128xf32>
    %34 = arith.mulf %23, %33 : vector<2x128xf32>
    %cst = arith.constant dense<0.000000e+00> : vector<128xf32>
    %35 = vector.multi_reduction <add>, %34, %cst [0] : vector<2x128xf32> to vector<128xf32>
    %36 = vector.shape_cast %35 : vector<128xf32> to vector<1x128xf32>
    %cst_15 = arith.constant dense<0.000000e+00> : vector<128xf32>
    %37 = vector.multi_reduction <add>, %23, %cst_15 [0] : vector<2x128xf32> to vector<128xf32>
    %38 = vector.shape_cast %37 : vector<128xf32> to vector<1x128xf32>
    %cst_16 = arith.constant dense<0.000000e+00> : vector<128xf32>
    %39 = vector.multi_reduction <add>, %33, %cst_16 [0] : vector<2x128xf32> to vector<128xf32>
    %40 = vector.shape_cast %39 : vector<128xf32> to vector<1x128xf32>
    %c1_i32 = arith.constant 1 : i32
    %41 = vector.broadcast %c1_i32 : i32 to vector<2x128xi32>
    %42 = arith.cmpi eq, %29, %41 : vector<2x128xi32>
    %43 = arith.extui %42 : vector<2x128xi1> to vector<2x128xi32>
    %44 = arith.sitofp %43 : vector<2x128xi32> to vector<2x128xf32>
    %45 = arith.mulf %24, %44 : vector<2x128xf32>
    %cst_17 = arith.constant dense<0.000000e+00> : vector<128xf32>
    %46 = vector.multi_reduction <add>, %45, %cst_17 [0] : vector<2x128xf32> to vector<128xf32>
    %47 = vector.shape_cast %46 : vector<128xf32> to vector<1x128xf32>
    %cst_18 = arith.constant dense<0.000000e+00> : vector<128xf32>
    %48 = vector.multi_reduction <add>, %24, %cst_18 [0] : vector<2x128xf32> to vector<128xf32>
    %49 = vector.shape_cast %48 : vector<128xf32> to vector<1x128xf32>
    %cst_19 = arith.constant dense<0.000000e+00> : vector<128xf32>
    %50 = vector.multi_reduction <add>, %44, %cst_19 [0] : vector<2x128xf32> to vector<128xf32>
    %51 = vector.shape_cast %50 : vector<128xf32> to vector<1x128xf32>
    %c2_i32 = arith.constant 2 : i32
    %52 = vector.broadcast %c2_i32 : i32 to vector<2x128xi32>
    %53 = arith.cmpi eq, %29, %52 : vector<2x128xi32>
    %54 = arith.extui %53 : vector<2x128xi1> to vector<2x128xi32>
    %55 = arith.sitofp %54 : vector<2x128xi32> to vector<2x128xf32>
    %56 = arith.mulf %25, %55 : vector<2x128xf32>
    %cst_20 = arith.constant dense<0.000000e+00> : vector<128xf32>
    %57 = vector.multi_reduction <add>, %56, %cst_20 [0] : vector<2x128xf32> to vector<128xf32>
    %58 = vector.shape_cast %57 : vector<128xf32> to vector<1x128xf32>
    %cst_21 = arith.constant dense<0.000000e+00> : vector<128xf32>
    %59 = vector.multi_reduction <add>, %25, %cst_21 [0] : vector<2x128xf32> to vector<128xf32>
    %60 = vector.shape_cast %59 : vector<128xf32> to vector<1x128xf32>
    %cst_22 = arith.constant dense<0.000000e+00> : vector<128xf32>
    %61 = vector.multi_reduction <add>, %55, %cst_22 [0] : vector<2x128xf32> to vector<128xf32>
    %62 = vector.shape_cast %61 : vector<128xf32> to vector<1x128xf32>
    %c3_i32 = arith.constant 3 : i32
    %63 = vector.broadcast %c3_i32 : i32 to vector<2x128xi32>
    %64 = arith.cmpi eq, %29, %63 : vector<2x128xi32>
    %65 = arith.extui %64 : vector<2x128xi1> to vector<2x128xi32>
    %66 = arith.sitofp %65 : vector<2x128xi32> to vector<2x128xf32>
    %67 = arith.mulf %26, %66 : vector<2x128xf32>
    %cst_23 = arith.constant dense<0.000000e+00> : vector<128xf32>
    %68 = vector.multi_reduction <add>, %67, %cst_23 [0] : vector<2x128xf32> to vector<128xf32>
    %69 = vector.shape_cast %68 : vector<128xf32> to vector<1x128xf32>
    %cst_24 = arith.constant dense<0.000000e+00> : vector<128xf32>
    %70 = vector.multi_reduction <add>, %26, %cst_24 [0] : vector<2x128xf32> to vector<128xf32>
    %71 = vector.shape_cast %70 : vector<128xf32> to vector<1x128xf32>
    %cst_25 = arith.constant dense<0.000000e+00> : vector<128xf32>
    %72 = vector.multi_reduction <add>, %66, %cst_25 [0] : vector<2x128xf32> to vector<128xf32>
    %73 = vector.shape_cast %72 : vector<128xf32> to vector<1x128xf32>
    %74 = tpu.concatenate %36, %47, %58, %69 in 0 : vector<1x128xf32>, vector<1x128xf32>, vector<1x128xf32>, vector<1x128xf32> -> vector<4x128xf32>
    %c0_26 = arith.constant 0 : index
    %c0_27 = arith.constant 0 : index
    %c0_28 = arith.constant 0 : index
    %c0_29 = arith.constant 0 : index
    %c0_30 = arith.constant 0 : index
    %75 = vector.load %arg4[%c0_26, %c0_27, %c0_28, %c0_29, %c0_30] : memref<1x1x3x4x128xf32, #tpu.memory_space<vmem>>, vector<1x1x1x4x128xf32>
    %76 = vector.shape_cast %75 : vector<1x1x1x4x128xf32> to vector<4x128xf32>
    %77 = vector.shape_cast %74 : vector<4x128xf32> to vector<1x1x1x4x128xf32>
    tpu.vector_store %arg4[%c0_26, %c0_27, %c0_28, %c0_29, %c0_30], %77 {strides = array<i32>} : memref<1x1x3x4x128xf32, #tpu.memory_space<vmem>>, vector<1x1x1x4x128xf32>,
    %78 = tpu.concatenate %38, %49, %60, %71 in 0 : vector<1x128xf32>, vector<1x128xf32>, vector<1x128xf32>, vector<1x128xf32> -> vector<4x128xf32>
    %c0_31 = arith.constant 0 : index
    %c0_32 = arith.constant 0 : index
    %c1_33 = arith.constant 1 : index
    %c0_34 = arith.constant 0 : index
    %c0_35 = arith.constant 0 : index
    %79 = vector.load %arg4[%c0_31, %c0_32, %c1_33, %c0_34, %c0_35] : memref<1x1x3x4x128xf32, #tpu.memory_space<vmem>>, vector<1x1x1x4x128xf32>
    %80 = vector.shape_cast %79 : vector<1x1x1x4x128xf32> to vector<4x128xf32>
    %81 = vector.shape_cast %78 : vector<4x128xf32> to vector<1x1x1x4x128xf32>
    tpu.vector_store %arg4[%c0_31, %c0_32, %c1_33, %c0_34, %c0_35], %81 {strides = array<i32>} : memref<1x1x3x4x128xf32, #tpu.memory_space<vmem>>, vector<1x1x1x4x128xf32>,
    %82 = tpu.concatenate %40, %51, %62, %73 in 0 : vector<1x128xf32>, vector<1x128xf32>, vector<1x128xf32>, vector<1x128xf32> -> vector<4x128xf32>
    %c0_36 = arith.constant 0 : index
    %c0_37 = arith.constant 0 : index
    %c2_38 = arith.constant 2 : index
    %c0_39 = arith.constant 0 : index
    %c0_40 = arith.constant 0 : index
    %83 = vector.load %arg4[%c0_36, %c0_37, %c2_38, %c0_39, %c0_40] : memref<1x1x3x4x128xf32, #tpu.memory_space<vmem>>, vector<1x1x1x4x128xf32>
    %84 = vector.shape_cast %83 : vector<1x1x1x4x128xf32> to vector<4x128xf32>
    %85 = vector.shape_cast %82 : vector<4x128xf32> to vector<1x1x1x4x128xf32>
    tpu.vector_store %arg4[%c0_36, %c0_37, %c2_38, %c0_39, %c0_40], %85 {strides = array<i32>} : memref<1x1x3x4x128xf32, #tpu.memory_space<vmem>>, vector<1x1x1x4x128xf32>,
    return
  }
  func.func @transform_0(%arg0: i32, %arg1: i32) -> (i32, i32, i32, i32) {
    %c0_i32 = arith.constant 0 : i32
    %c0_i32_0 = arith.constant 0 : i32
    %c0_i32_1 = arith.constant 0 : i32
    return %arg0, %c0_i32, %arg1, %c0_i32_0 : i32, i32, i32, i32
  }
  func.func @transform_1(%arg0: i32, %arg1: i32) -> (i32, i32, i32) {
    %c0_i32 = arith.constant 0 : i32
    %c0_i32_0 = arith.constant 0 : i32
    return %arg0, %arg1, %c0_i32 : i32, i32, i32
  }
  func.func @transform_2(%arg0: i32, %arg1: i32) -> (i32, i32, i32, i32, i32) {
    %c0_i32 = arith.constant 0 : i32
    %c0_i32_0 = arith.constant 0 : i32
    %c0_i32_1 = arith.constant 0 : i32
    %c0_i32_2 = arith.constant 0 : i32
    return %arg0, %arg1, %c0_i32, %c0_i32_0, %c0_i32_1 : i32, i32, i32, i32, i32
  }
}

</mosaic_0001>

<llo_original>
// kernel: tpu_custom_call.1
$region0: #{tpu_custom_call.1}
  #allocation0 [shape = 'u32[]', space=smem, size = 0x4, offset = 0x4, fixed_abs, tag = 'smem constant byte address 0x4 - core index']
  #allocation1 [shape = 'u32[144,128]{1,0:T(1,128)}', space=vmem, size = 0x12000, scoped, tag = 'internal scratch']
  %s0 = inlined_call_operand.hbm [shape: f32[2,4,2,128], index: 0, kind: input, shape index: {}]
  %s1 = inlined_call_operand.vmem [shape: s8[2,2,128], index: 1, kind: input, shape index: {}]
  %s2 = inlined_call_operand.hbm [shape: f32[2,1,3,4,128], index: 2, kind: output, shape index: {}]
  %s3 = sld [smem:[#allocation0]]
  $region45: #{tpu_custom_call.1} parent=0
    _
  %s5 = ssub.s32 1, %s3
  %s6 = scalar_select 0, %s5, %s3
  $region1: #{tpu_custom_call.1} parent=0
    #allocation2 [shape = 'u8[8192]{0}', space=vmem, size = 0x2000, scoped, tag = 'input window, operand 0']
    #allocation3 [shape = 's32[2]{0}', space=sflag, size = 0x8, scoped, tag = 'scoped memory for tpu_custom_call.1']
    #allocation4 [shape = 's32[2]{0}', space=sflag, size = 0x8, scoped, tag = 'scoped memory for tpu_custom_call.1']
    #allocation5 [shape = 'u8[12288]{0}', space=vmem, size = 0x3000, scoped, tag = 'output window, operand 0']
    %7 = vsyncpa [#allocation3], 0
    %s8 = scalar_lea.sflag [#allocation3], 1
    %9 = vsyncpa %s8, 0
    %10 = vsyncpa [#allocation4], 0
    %s11 = scalar_lea.sflag [#allocation4], 1
    %12 = vsyncpa %s11, 0
    loop: start=0, step=1, limit=4
    $region2: #{tpu_custom_call.1} parent=1 // loop_pre_header
      _
    $region3: #{tpu_custom_call.1} parent=1 // loop_header
      %s14 = sphi 0, %s18
      %p15 = scmp.ge.s32.totalorder %s14, 4
      %s21 = sphi 0, %s33
      %s22 = sphi 0, %s29
      %s23 = sphi 0, %s21
      %s24 = sphi 0, %s22
      %s25 = sphi 0, %s23
      %s26 = sphi 0, %s24
      %s38 = sphi 0, %s40
      %s41 = sphi 0, %s38
      %s42 = sphi 0, %s41
      %s58 = sphi 0, %s42
      %s66 = sphi 0, %s68
      %s69 = sphi 0, %s66
      %s70 = sphi 0, %s69
      %s86 = sphi 0, %s70
      %s94 = sphi 0, %s96
      %s97 = sphi 0, %s94
      %s98 = sphi 0, %s97
      %s114 = sphi 0, %s98
    $region4: #{tpu_custom_call.1} parent=1 // loop_header_branch
      %17 = sbr.rel (%p15) target = $region8
    $region5: #{tpu_custom_call.1} parent=1 // loop_body
      %s19 = ssub.s32 %s14, 1
      %s20 = ssub.s32 %s14, 2
      %s27 = sadd.s32 1, %s22
      %p28 = scmp.ge.s32.totalorder %s27, 1
      %s29 = scalar_select %p28, 0, %s27
      %s30 = sadd.s32 1, %s21
      %s31 = scalar_select %p28, %s30, %s21
      %p32 = scmp.ge.s32.totalorder %s31, 2
      %s33 = scalar_select %p32, 0, %s31
      %s34 = ssub.s32 %s21, %s33
      %s35 = ssub.s32 %s22, %s29
      %s36 = sor.u32 %s34, %s35
      %p37 = scmp.eq.s32.totalorder %s36, 0
      %s39 = sadd.s32 %s38, 1
      %s40 = scalar_select %p37, %s38, %s39
      %p43 = pneg %p37
      %p44 = scmp.eq.s32.totalorder %s14, 1
      %p45 = por %p43, %p44
      %p46 = scmp.ne.s32.totalorder %s38, %s41
      %p47 = scmp.eq.s32.totalorder %s14, 0
      %p48 = por %p46, %p47
      %p49 = scmp.ne.s32.totalorder %s38, %s41
      %p50 = scmp.eq.s32.totalorder %s19, 1
      %p51 = por %p49, %p50
      %p52 = scmp.ne.s32.totalorder %s41, %s42
      %p53 = scmp.eq.s32.totalorder %s19, 0
      %p54 = por %p52, %p53
      %p55 = scmp.ne.s32.totalorder %s41, %s42
      %p56 = scmp.eq.s32.totalorder %s20, 1
      %p57 = por %p55, %p56
      %p59 = scmp.ne.s32.totalorder %s42, %s58
      %p60 = scmp.eq.s32.totalorder %s20, 0
      %p61 = por %p59, %p60
      %s62 = ssub.s32 %s21, %s33
      %s63 = ssub.s32 %s22, %s29
      %s64 = sor.u32 %s62, %s63
      %p65 = scmp.eq.s32.totalorder %s64, 0
      %s67 = sadd.s32 %s66, 1
      %s68 = scalar_select %p65, %s66, %s67
      %p71 = pneg %p65
      %p72 = scmp.eq.s32.totalorder %s14, 1
      %p73 = por %p71, %p72
      %p74 = scmp.ne.s32.totalorder %s66, %s69
      %p75 = scmp.eq.s32.totalorder %s14, 0
      %p76 = por %p74, %p75
      %p77 = scmp.ne.s32.totalorder %s66, %s69
      %p78 = scmp.eq.s32.totalorder %s19, 1
      %p79 = por %p77, %p78
      %p80 = scmp.ne.s32.totalorder %s69, %s70
      %p81 = scmp.eq.s32.totalorder %s19, 0
      %p82 = por %p80, %p81
      %p83 = scmp.ne.s32.totalorder %s69, %s70
      %p84 = scmp.eq.s32.totalorder %s20, 1
      %p85 = por %p83, %p84
      %p87 = scmp.ne.s32.totalorder %s70, %s86
      %p88 = scmp.eq.s32.totalorder %s20, 0
      %p89 = por %p87, %p88
      %s90 = ssub.s32 %s21, %s33
      %s91 = ssub.s32 %s22, %s29
      %s92 = sor.u32 %s90, %s91
      %p93 = scmp.eq.s32.totalorder %s92, 0
      %s95 = sadd.s32 %s94, 1
      %s96 = scalar_select %p93, %s94, %s95
      %p99 = pneg %p93
      %p100 = scmp.eq.s32.totalorder %s14, 1
      %p101 = por %p99, %p100
      %p102 = scmp.ne.s32.totalorder %s94, %s97
      %p103 = scmp.eq.s32.totalorder %s14, 0
      %p104 = por %p102, %p103
      %p105 = scmp.ne.s32.totalorder %s94, %s97
      %p106 = scmp.eq.s32.totalorder %s19, 1
      %p107 = por %p105, %p106
      %p108 = scmp.ne.s32.totalorder %s97, %s98
      %p109 = scmp.eq.s32.totalorder %s19, 0
      %p110 = por %p108, %p109
      %p111 = scmp.ne.s32.totalorder %s97, %s98
      %p112 = scmp.eq.s32.totalorder %s20, 1
      %p113 = por %p111, %p112
      %p115 = scmp.ne.s32.totalorder %s98, %s114
      %p116 = scmp.eq.s32.totalorder %s20, 0
      %p117 = por %p115, %p116
      %p118 = scmp.le.s32.totalorder 1, %s14
      %p119 = scmp.lt.s32.totalorder %s14, 3
      %p120 = pnand %p118, %p119
      %p121 = pneg %p120
      // Predicated region
      $region9: #{tpu_custom_call.1} parent=5 // pred_check
        _
      $region10: #{tpu_custom_call.1} parent=5 // pred_check_branch
        %123 = sbr.rel (%p120) target = $region12
      $region11: #{tpu_custom_call.1} parent=5 // pred_region
        %s124 = ssub.s32 %s14, 1
      $region12: #{tpu_custom_call.1} parent=5 // pred_fallthru
        _
      %p125 = scmp.lt.s32.totalorder %s14, 2
      // Predicated region
      $region13: #{tpu_custom_call.1} parent=5 // pred_check
        %p126 = pneg %p125
      $region14: #{tpu_custom_call.1} parent=5 // pred_check_branch
        %128 = sbr.rel (%p126) target = $region16
      $region15: #{tpu_custom_call.1} parent=5 // pred_region
        // Predicated region
        $region17: #{tpu_custom_call.1} parent=15 // pred_check
          %p129 = pneg %p48
        $region18: #{tpu_custom_call.1} parent=15 // pred_check_branch
          %131 = sbr.rel (%p129) target = $region20
        $region19: #{tpu_custom_call.1} parent=15 // pred_region
          %s132 = sand.u32 %s38, 1
          %s133 = scalar_lea.sflag [#allocation3], %s132
          %s134 = sand.u32 %s38, 1
          %s135 = smul.addr %s134, 8
          %s136 = scalar_lea.vmem [#allocation2], %s135
          %s138 = ssub.s32 128, 128
          %139 = vsyncadd %s133, %s138
          %s140 = smul.addr %s21, 4
          %s141 = sadd.s32 %s22, %s140
          %s142 = smul.addr %s141, 32
          %s143 = scalar_lea.hbm %s0, %s142
          %s144 = sshll.u32 %s136, 4
          %s145 = int_to_ptr.vmem [resolvable:$true] %s144
          %150 = dma.hbm_to_vmem [thread:$0]  %s143, 128, %s145, %s133, 32, 32, 2
        $region20: #{tpu_custom_call.1} parent=15 // pred_fallthru
          _
        // Predicated region
        $region21: #{tpu_custom_call.1} parent=15 // pred_check
          %p151 = pneg %p76
        $region22: #{tpu_custom_call.1} parent=15 // pred_check_branch
          %153 = sbr.rel (%p151) target = $region24
        $region23: #{tpu_custom_call.1} parent=15 // pred_region
          %p154 = scmp.lt.s32.totalorder %s21, 1
          %s155 = scalar_select %p154, %s21, 1
          %p156 = scmp.lt.s32.totalorder %s22, 0
          %s157 = scalar_select %p156, %s22, 0
          %s158 = sadd.s32 %s157, %s155
          %s159 = scalar_lea.vmem %s1, %s158
        $region24: #{tpu_custom_call.1} parent=15 // pred_fallthru
          _
      $region16: #{tpu_custom_call.1} parent=5 // pred_fallthru
        _
      %p160 = scmp.le.s32.totalorder 1, %s14
      %p161 = scmp.lt.s32.totalorder %s14, 3
      %p162 = pnand %p160, %p161
      %p163 = pneg %p162
      // Predicated region
      $region25: #{tpu_custom_call.1} parent=5 // pred_check
        _
      $region26: #{tpu_custom_call.1} parent=5 // pred_check_branch
        %165 = sbr.rel (%p162) target = $region28
      $region27: #{tpu_custom_call.1} parent=5 // pred_region
        %s166 = ssub.s32 %s14, 1
        %s167 = sand.u32 %s41, 1
        %s168 = scalar_lea.sflag [#allocation3], %s167
        %s169 = sand.u32 %s41, 1
        %s170 = smul.addr %s169, 8
        %s171 = scalar_lea.vmem [#allocation2], %s170
        // Predicated region
        $region29: #{tpu_custom_call.1} parent=27 // pred_check
          %p172 = pneg %p54
        $region30: #{tpu_custom_call.1} parent=27 // pred_check_branch
          %174 = sbr.rel (%p172) target = $region32
        $region31: #{tpu_custom_call.1} parent=27 // pred_region
          %175 = dma.done %s168, 128
        $region32: #{tpu_custom_call.1} parent=27 // pred_fallthru
          _
        %s176 = sand.u32 %s41, 1
        %s177 = scalar_lea.sflag [#allocation3], %s176
        %s178 = sand.u32 %s41, 1
        %s179 = smul.addr %s178, 8
        %s180 = scalar_lea.vmem [#allocation2], %s179
        %p181 = pneg %p54
        %p182 = pneg %p51
        %p183 = scmp.lt.s32.totalorder %s23, 1
        %s184 = scalar_select %p183, %s23, 1
        %p185 = scmp.lt.s32.totalorder %s24, 0
        %s186 = scalar_select %p185, %s24, 0
        %s187 = sadd.s32 %s186, %s184
        %s188 = scalar_lea.vmem %s1, %s187
        %p189 = pneg %p82
        %p190 = pneg %p79
        %p191 = pneg %p110
        %p192 = pneg %p107
        %s193 = sand.u32 %s97, 1
        %s194 = scalar_lea.sflag [#allocation4], %s193
        %s195 = sand.u32 %s97, 1
        %s196 = smul.addr %s195, 12
        %s197 = scalar_lea.vmem [#allocation5], %s196
        %p198 = scmp.lt.s32.totalorder %s23, 1
        %s199 = scalar_select %p198, %s23, 1
        %p200 = scmp.lt.s32.totalorder %s24, 0
        %s201 = scalar_select %p200, %s24, 0
        %s202 = sadd.s32 %s201, %s199
        %s203 = scalar_lea.vmem %s1, %s202
        %v204 = vld [vmem:[%s171] sm:$0x3]
        %s205 = scalar_lea.vmem %s171, 2 [#allocation2]
        %v206 = vld [vmem:[%s205] sm:$0x3]
        %s207 = scalar_lea.vmem %s171, 4 [#allocation2]
        %v208 = vld [vmem:[%s207] sm:$0x3]
        %s209 = scalar_lea.vmem %s171, 6 [#allocation2]
        %v210 = vld [vmem:[%s209] sm:$0x3]
        %v211 = vmax.f32 %v204, %v206
        %v212 = vmax.f32 %v211, %v208
        %v213 = vmax.f32 %v212, %v210
        %v214 = vsub.f32 %v204, %v213
        %v215 = vmul.f32 %v214, 1.442695
        %v216 = vpow.pop %v215
        %v217 = vsub.f32 %v206, %v213
        %v218 = vmul.f32 %v217, 1.442695
        %v219 = vpow.pop %v218
        %v220 = vsub.f32 %v208, %v213
        %v221 = vmul.f32 %v220, 1.442695
        %v222 = vpow.pop %v221
        %v223 = vsub.f32 %v210, %v213
        %v224 = vmul.f32 %v223, 1.442695
        %v225 = vpow.pop %v224
        %v226 = vadd.f32 %v216, %v219
        %v227 = vadd.f32 %v226, %v222
        %v228 = vadd.f32 %v227, %v225
        %v229 = vrcp.pop %v228
        %v230 = vmul.f32 %v216, %v229
        %v231 = vmul.f32 %v219, %v229
        %v232 = vmul.f32 %v222, %v229
        %v233 = vmul.f32 %v225, %v229
        %v234 = vld [vmem:[%s203] sm:$0x1]
        %v235 = vunpack.c.0.s8 %v234
        %vm236 = vcmp.eq.s32.totalorder %v235, 0
        %v237 = vsel %vm236, 1, 0
        %v238 = vcvt.s32.f32 %v237
        %v239 = vmul.f32 %v230, %v238
        %vm240 = vcmask 1041408
        %v241 = vsel %vm240, %v239, 0.0
        %v242 = vrot.slane %v241, 4
        %v243 = vadd.f32 %v241, %v242
        %v244 = vrot.slane %v243, 2
        %v245 = vadd.f32 %v243, %v244
        %v246 = vrot.slane %v245, 1
        %v247 = vadd.f32 %v245, %v246
        %v248 = vsel %vm240, %v230, 0.0
        %v249 = vrot.slane %v248, 4
        %v250 = vadd.f32 %v248, %v249
        %v251 = vrot.slane %v250, 2
        %v252 = vadd.f32 %v250, %v251
        %v253 = vrot.slane %v252, 1
        %v254 = vadd.f32 %v252, %v253
        %v255 = vsel %vm240, %v238, 0.0
        %v256 = vrot.slane %v255, 4
        %v257 = vadd.f32 %v255, %v256
        %v258 = vrot.slane %v257, 2
        %v259 = vadd.f32 %v257, %v258
        %v260 = vrot.slane %v259, 1
        %v261 = vadd.f32 %v259, %v260
        %vm262 = vcmp.eq.s32.totalorder %v235, 1
        %v263 = vsel %vm262, 1, 0
        %v264 = vcvt.s32.f32 %v263
        %v265 = vmul.f32 %v231, %v264
        %v266 = vsel %vm240, %v265, 0.0
        %v267 = vrot.slane %v266, 4
        %v268 = vadd.f32 %v266, %v267
        %v269 = vrot.slane %v268, 2
        %v270 = vadd.f32 %v268, %v269
        %v271 = vrot.slane %v270, 1
        %v272 = vadd.f32 %v270, %v271
        %v273 = vsel %vm240, %v231, 0.0
        %v274 = vrot.slane %v273, 4
        %v275 = vadd.f32 %v273, %v274
        %v276 = vrot.slane %v275, 2
        %v277 = vadd.f32 %v275, %v276
        %v278 = vrot.slane %v277, 1
        %v279 = vadd.f32 %v277, %v278
        %v280 = vsel %vm240, %v264, 0.0
        %v281 = vrot.slane %v280, 4
        %v282 = vadd.f32 %v280, %v281
        %v283 = vrot.slane %v282, 2
        %v284 = vadd.f32 %v282, %v283
        %v285 = vrot.slane %v284, 1
        %v286 = vadd.f32 %v284, %v285
        %vm287 = vcmp.eq.s32.totalorder %v235, 2
        %v288 = vsel %vm287, 1, 0
        %v289 = vcvt.s32.f32 %v288
        %v290 = vmul.f32 %v232, %v289
        %v291 = vsel %vm240, %v290, 0.0
        %v292 = vrot.slane %v291, 4
        %v293 = vadd.f32 %v291, %v292
        %v294 = vrot.slane %v293, 2
        %v295 = vadd.f32 %v293, %v294
        %v296 = vrot.slane %v295, 1
        %v297 = vadd.f32 %v295, %v296
        %v298 = vsel %vm240, %v232, 0.0
        %v299 = vrot.slane %v298, 4
        %v300 = vadd.f32 %v298, %v299
        %v301 = vrot.slane %v300, 2
        %v302 = vadd.f32 %v300, %v301
        %v303 = vrot.slane %v302, 1
        %v304 = vadd.f32 %v302, %v303
        %v305 = vsel %vm240, %v289, 0.0
        %v306 = vrot.slane %v305, 4
        %v307 = vadd.f32 %v305, %v306
        %v308 = vrot.slane %v307, 2
        %v309 = vadd.f32 %v307, %v308
        %v310 = vrot.slane %v309, 1
        %v311 = vadd.f32 %v309, %v310
        %vm312 = vcmp.eq.s32.totalorder %v235, 3
        %v313 = vsel %vm312, 1, 0
        %v314 = vcvt.s32.f32 %v313
        %v315 = vmul.f32 %v233, %v314
        %v316 = vsel %vm240, %v315, 0.0
        %v317 = vrot.slane %v316, 4
        %v318 = vadd.f32 %v316, %v317
        %v319 = vrot.slane %v318, 2
        %v320 = vadd.f32 %v318, %v319
        %v321 = vrot.slane %v320, 1
        %v322 = vadd.f32 %v320, %v321
        %v323 = vsel %vm240, %v233, 0.0
        %v324 = vrot.slane %v323, 4
        %v325 = vadd.f32 %v323, %v324
        %v326 = vrot.slane %v325, 2
        %v327 = vadd.f32 %v325, %v326
        %v328 = vrot.slane %v327, 1
        %v329 = vadd.f32 %v327, %v328
        %v330 = vsel %vm240, %v314, 0.0
        %v331 = vrot.slane %v330, 4
        %v332 = vadd.f32 %v330, %v331
        %v333 = vrot.slane %v332, 2
        %v334 = vadd.f32 %v332, %v333
        %v335 = vrot.slane %v334, 1
        %v336 = vadd.f32 %v334, %v335
        %vm337 = vcmask 1040384
        %v338 = vsel %vm337, %v247, %v272
        %v339 = vsel %vm240, %v338, %v297
        %vm340 = vcmask 1042432
        %v341 = vsel %vm340, %v339, %v322
        %342 = vst [vmem:[%s197] sm:$0xf] %v341
        %v343 = vsel %vm337, %v254, %v279
        %v344 = vsel %vm240, %v343, %v304
        %v345 = vsel %vm340, %v344, %v329
        %s346 = scalar_lea.vmem %s197, 4 [#allocation5]
        %347 = vst [vmem:[%s346] sm:$0xf] %v345
        %v348 = vsel %vm337, %v261, %v286
        %v349 = vsel %vm240, %v348, %v311
        %v350 = vsel %vm340, %v349, %v336
        %s351 = scalar_lea.vmem %s197, 8 [#allocation5]
        %352 = vst [vmem:[%s351] sm:$0xf] %v350
        %s353 = sand.u32 %s97, 1
        %s354 = scalar_lea.sflag [#allocation4], %s353
        %s355 = sand.u32 %s97, 1
        %s356 = smul.addr %s355, 12
        %s357 = scalar_lea.vmem [#allocation5], %s356
        // Predicated region
        $region33: #{tpu_custom_call.1} parent=27 // pred_check
          %p358 = pneg %p107
        $region34: #{tpu_custom_call.1} parent=27 // pred_check_branch
          %360 = sbr.rel (%p358) target = $region36
        $region35: #{tpu_custom_call.1} parent=27 // pred_region
          %s362 = ssub.s32 192, 192
          %363 = vsyncadd %s354, %s362
          %s364 = smul.addr %s24, 3
          %s365 = smul.addr %s23, 3
          %s366 = sadd.s32 %s364, %s365
          %s367 = smul.addr %s366, 64
          %s368 = scalar_lea.hbm %s2, %s367
          %s369 = sshll.u32 %s357, 4
          %s370 = int_to_ptr.vmem [resolvable:$true] %s369
          %375 = dma.vmem_to_hbm [thread:$0]  %s370, 192, %s368, %s354, 64, 64, 4
        $region36: #{tpu_custom_call.1} parent=27 // pred_fallthru
          _
      $region28: #{tpu_custom_call.1} parent=5 // pred_fallthru
        _
      %p376 = scmp.le.s32.totalorder 2, %s14
      // Predicated region
      $region37: #{tpu_custom_call.1} parent=5 // pred_check
        %p377 = pneg %p376
      $region38: #{tpu_custom_call.1} parent=5 // pred_check_branch
        %379 = sbr.rel (%p377) target = $region40
      $region39: #{tpu_custom_call.1} parent=5 // pred_region
        %s380 = ssub.s32 %s14, 2
        // Predicated region
        $region41: #{tpu_custom_call.1} parent=39 // pred_check
          %p381 = pneg %p113
        $region42: #{tpu_custom_call.1} parent=39 // pred_check_branch
          %383 = sbr.rel (%p381) target = $region44
        $region43: #{tpu_custom_call.1} parent=39 // pred_region
          %s384 = sand.u32 %s98, 1
          %s385 = scalar_lea.sflag [#allocation4], %s384
          %s386 = sand.u32 %s98, 1
          %s387 = smul.addr %s386, 12
          %s388 = scalar_lea.vmem [#allocation5], %s387
          %389 = dma.done %s385, 192
        $region44: #{tpu_custom_call.1} parent=39 // pred_fallthru
          _
      $region40: #{tpu_custom_call.1} parent=5 // pred_fallthru
        _
    $region6: #{tpu_custom_call.1} parent=1 // loop_footer
      %s18 = sadd.s32 1, %s14
    $region7: #{tpu_custom_call.1} parent=1 // loop_footer_branch
      %13 = sbr.rel target = $region3
    $region8: #{tpu_custom_call.1} parent=1 // loop_exit
      _
    %390 = vsyncpa [#allocation3], 1
    %s391 = scalar_lea.sflag [#allocation3], 1
    %392 = vsyncpa %s391, 1
    %393 = vsyncpa [#allocation4], 1
    %s394 = scalar_lea.sflag [#allocation4], 1
    %395 = vsyncpa %s394, 1

</llo_original>
